<compile_context>
chip_gen: v7x
topology: tpu7x:2x2x1
jax: 0.10.0
libtpu: 0.0.40
codegen_flags: <defaults>
</compile_context>

<pallas_src>
import functools

import jax
import jax.numpy as jnp
import numpy as np
from jax.experimental import pallas as pl
from jax.experimental.pallas import tpu as pltpu

# --- "config" stand-ins (module referenced config.HIDDEN_DIM / config.OUTPUT_DIM) ---
HIDDEN_DIM = (64, 32)   # hidden_dim list
OUTPUT_DIM = 8          # output_dim
INPUT_DIM = 32          # must be supplied to FFClassifier
BATCH = 32              # demo batch

LANE = 128              # TPU lane width  (last-dim tiling unit)
SUBLANE = 8             # TPU sublane width (second-last-dim tiling unit)


def _round_up(x, m):
    return (x + m - 1) // m * m


def _ff_kernel(n_layers, *refs):
    """refs = (x, w0, b0, a0, w1, b1, a1, ..., w_last, b_last, out_ref).

    Every layer except the last is followed by PReLU with a scalar alpha
    (read from SMEM).  Matmuls run in bf16 on the MXU with f32 accumulation;
    bias add + PReLU stay in f32 on the VPU.
    """
    x_ref = refs[0]
    out_ref = refs[-1]
    param_refs = refs[1:-1]

    h = x_ref[...]                               # bf16 activations straight off HBM
    idx = 0
    for layer in range(n_layers):
        is_last = layer == n_layers - 1
        w_ref = param_refs[idx]; idx += 1
        b_ref = param_refs[idx]; idx += 1
        y = jnp.dot(h.astype(jnp.bfloat16), w_ref[...],
                    preferred_element_type=jnp.float32)
        y = y + b_ref[...]                       # f32 bias add (VPU)
        if not is_last:
            a_ref = param_refs[idx]; idx += 1
            alpha = a_ref[0, 0]                  # scalar PReLU slope (SMEM)
            y = jnp.where(y > 0, y, alpha * y)   # f32 PReLU (VPU)
        h = y
    out_ref[...] = h.astype(out_ref.dtype)


def prepare_params(params):
    """Prepare (W, b, alpha) per layer for the kernel.

    Hidden feature dims are zero-padded to 128 lanes (lane-dense intermediate
    activations that never touch HBM); the input dim of the first layer and
    the output dim of the last layer are left unpadded so HBM I/O stays
    narrow.  W -> bf16, b -> (1, N) f32, alpha -> (1,1) f32 (SMEM scalar).
    Zero padding keeps padded activation lanes exactly zero (PReLU(0)=0).
    """
    n = len(params)
    padded = []
    for li, (w, b, alpha) in enumerate(params):
        din, dout = w.shape
        din_p = din if li == 0 else _round_up(din, LANE)
        dout_p = dout if li == n - 1 else _round_up(dout, LANE)
        w_p = (jnp.zeros((din_p, dout_p), jnp.float32)
               .at[:din, :dout].set(w).astype(jnp.bfloat16))
        b_p = jnp.zeros((1, dout_p), jnp.float32).at[0, :dout].set(b)
        a_p = None if alpha is None else jnp.asarray(alpha, jnp.float32).reshape(1, 1)
        padded.append((w_p, b_p, a_p))
    return padded


def ff_classifier_forward(x, padded_params, out_dim, *, block_batch=1024):
    """x: (batch, input_dim) f32 (or bf16).  padded_params from prepare_params()."""
    n_layers = len(padded_params)
    batch, in_dim = x.shape
    out_width = padded_params[-1][0].shape[1]          # == out_dim (unpadded)
    assert out_width == out_dim

    # Batch tiling: pad only to a multiple of 8, then pick balanced tiles.
    block_batch = max(SUBLANE, _round_up(block_batch, SUBLANE))
    padded8 = _round_up(batch, SUBLANE)
    tb0 = min(block_batch, padded8)
    grid = pl.cdiv(padded8, tb0)
    # v7x: keep >= 2 grid steps at large batch so the "parallel" axis shards
    # across both TensorCores (only when each half is still a decent tile).
    if grid == 1 and padded8 >= 2 * 256:
        grid = 2
    tb = _round_up(pl.cdiv(padded8, grid), SUBLANE)
    padded_batch = grid * tb

    # Cast once to bf16 (matches the MXU operand dtype) and pad batch rows only.
    x_bf16 = x.astype(jnp.bfloat16)
    if padded_batch != batch:
        x_p = jnp.zeros((padded_batch, in_dim), jnp.bfloat16).at[:batch, :].set(x_bf16)
    else:
        x_p = x_bf16

    flat_inputs = [x_p]
    in_specs = [pl.BlockSpec((tb, in_dim), lambda i: (i, 0))]   # last dim == full dim
    for (w, b, alpha) in padded_params:
        flat_inputs.append(w)
        in_specs.append(pl.BlockSpec(w.shape, lambda i: (0, 0)))   # VMEM-resident
        flat_inputs.append(b)
        in_specs.append(pl.BlockSpec(b.shape, lambda i: (0, 0)))   # VMEM-resident
        if alpha is not None:
            flat_inputs.append(alpha)
            in_specs.append(pl.BlockSpec((1, 1), lambda i: (0, 0),
                                         memory_space=pltpu.MemorySpace.SMEM))

    kernel = functools.partial(_ff_kernel, n_layers)

    out_p = pl.pallas_call(
        kernel,
        out_shape=jax.ShapeDtypeStruct((padded_batch, out_dim), jnp.float32),
        grid=(grid,),
        in_specs=in_specs,
        out_specs=pl.BlockSpec((tb, out_dim), lambda i: (i, 0)),   # narrow, unpadded
        compiler_params=pltpu.CompilerParams(
            dimension_semantics=("parallel",)),
    )(*flat_inputs)

    if padded_batch != batch:
        return out_p[:batch]
    return out_p


def init_params(key, input_dim, hidden_dim, output_dim):
    """Deterministic init mirroring the layer structure of FFClassifier."""
    dims = [input_dim] + list(hidden_dim) + [output_dim]
    params = []
    n_layers = len(dims) - 1
    for i in range(n_layers):
        key, kw, kb = jax.random.split(key, 3)
        fan_in = dims[i]
        bound = 1.0 / np.sqrt(fan_in)
        w = jax.random.uniform(kw, (dims[i], dims[i + 1]), jnp.float32, -bound, bound)
        b = jax.random.uniform(kb, (dims[i + 1],), jnp.float32, -bound, bound)
        alpha = 0.25 if i < n_layers - 1 else None   # PReLU after all but last Linear
        params.append((w, b, alpha))
    return params


def reference_forward(x, params, *, bf16_matmul=True):
    """Pure-JAX reference.  bf16_matmul matches the kernel's MXU dtype."""
    h = x
    for (w, b, alpha) in params:
        if bf16_matmul:
            h = jnp.dot(h.astype(jnp.bfloat16), w.astype(jnp.bfloat16),
                        preferred_element_type=jnp.float32) + b
        else:
            h = h @ w + b
        if alpha is not None:
            h = jnp.where(h > 0, h, alpha * h)
    return h


if __name__ == "__main__":
    key = jax.random.PRNGKey(0)
    kx, kp = jax.random.split(key)

    x = jax.random.normal(kx, (BATCH, INPUT_DIM), jnp.float32)
    params = init_params(kp, INPUT_DIM, HIDDEN_DIM, OUTPUT_DIM)
    padded_params = prepare_params(params)

    # (a) small-tile path: multi-step grid (exercises pipelining / parallel axis)
    out_grid = ff_classifier_forward(x, padded_params, OUTPUT_DIM, block_batch=8)
    out_grid = jax.block_until_ready(out_grid)

    # (b) default large-tile path (single step at this demo batch)
    out_big = ff_classifier_forward(x, padded_params, OUTPUT_DIM)
    out_big = jax.block_until_ready(out_big)

    ref_bf16 = reference_forward(x, params, bf16_matmul=True)
    ref_f32 = reference_forward(x, params, bf16_matmul=False)

    np.testing.assert_allclose(np.asarray(out_grid), np.asarray(ref_bf16),
                               rtol=1e-3, atol=1e-3)
    np.testing.assert_allclose(np.asarray(out_big), np.asarray(ref_bf16),
                               rtol=1e-3, atol=1e-3)
    # sanity check vs full-f32 math (loose: bf16 operand rounding)
    np.testing.assert_allclose(np.asarray(out_big), np.asarray(ref_f32),
                               rtol=5e-2, atol=5e-2)

    print("KERNEL_OK")
</pallas_src>

<mosaic_0001>
module attributes {stable_mosaic.version = 11 : i64} {
  func.func @_ff_kernel(%arg0: i32, %arg1: memref<8x32xbf16, #tpu.memory_space<vmem>>, %arg2: memref<32x128xbf16, #tpu.memory_space<vmem>>, %arg3: memref<1x128xf32, #tpu.memory_space<vmem>>, %arg4: memref<1x1xf32, #tpu.memory_space<smem>>, %arg5: memref<128x128xbf16, #tpu.memory_space<vmem>>, %arg6: memref<1x128xf32, #tpu.memory_space<vmem>>, %arg7: memref<1x1xf32, #tpu.memory_space<smem>>, %arg8: memref<128x8xbf16, #tpu.memory_space<vmem>>, %arg9: memref<1x8xf32, #tpu.memory_space<vmem>>, %arg10: memref<8x8xf32, #tpu.memory_space<vmem>>) attributes {dimension_semantics = [#tpu.dimension_semantics<parallel>], iteration_bounds = array<i64: 4>, scalar_prefetch = 0 : i64, scratch_operands = 0 : i64, tpu.core_type = #tpu.core_type<tc>, window_params = [{transform_indices = @transform_0, window_bounds = array<i64: 8, 32>}, {pipeline_mode = #tpu.pipeline_mode<synchronous>, transform_indices = @transform_1, window_bounds = array<i64: 32, 128>}, {pipeline_mode = #tpu.pipeline_mode<synchronous>, transform_indices = @transform_2, window_bounds = array<i64: 1, 128>}, {transform_indices = @transform_3, window_bounds = array<i64: 1, 1>}, {pipeline_mode = #tpu.pipeline_mode<synchronous>, transform_indices = @transform_4, window_bounds = array<i64: 128, 128>}, {pipeline_mode = #tpu.pipeline_mode<synchronous>, transform_indices = @transform_5, window_bounds = array<i64: 1, 128>}, {transform_indices = @transform_6, window_bounds = array<i64: 1, 1>}, {pipeline_mode = #tpu.pipeline_mode<synchronous>, transform_indices = @transform_7, window_bounds = array<i64: 128, 8>}, {pipeline_mode = #tpu.pipeline_mode<synchronous>, transform_indices = @transform_8, window_bounds = array<i64: 1, 8>}, {transform_indices = @transform_9, window_bounds = array<i64: 8, 8>}]} {
    %c0 = arith.constant 0 : index
    %c0_0 = arith.constant 0 : index
    %0 = vector.load %arg1[%c0, %c0_0] : memref<8x32xbf16, #tpu.memory_space<vmem>>, vector<8x32xbf16>
    %c0_1 = arith.constant 0 : index
    %c0_2 = arith.constant 0 : index
    %1 = vector.load %arg2[%c0_1, %c0_2] : memref<32x128xbf16, #tpu.memory_space<vmem>>, vector<32x128xbf16>
    %cst = arith.constant dense<0.000000e+00> : vector<8x128xf32>
    %2 = tpu.matmul %0, %1, %cst {dimension_numbers = #tpu.dot_dimension_numbers<[1], [0], [0], [1], [0, 0, 1, 1], [], []>} : vector<8x32xbf16>, vector<32x128xbf16>, vector<8x128xf32> -> vector<8x128xf32>
    %c0_3 = arith.constant 0 : index
    %c0_4 = arith.constant 0 : index
    %3 = vector.load %arg3[%c0_3, %c0_4] : memref<1x128xf32, #tpu.memory_space<vmem>>, vector<1x128xf32>
    %4 = vector.broadcast %3 : vector<1x128xf32> to vector<8x128xf32>
    %5 = arith.addf %2, %4 : vector<8x128xf32>
    %c0_5 = arith.constant 0 : index
    %c0_6 = arith.constant 0 : index
    %6 = memref.load %arg4[%c0_5, %c0_6] : memref<1x1xf32, #tpu.memory_space<smem>>
    %cst_7 = arith.constant 0.000000e+00 : f32
    %7 = vector.broadcast %cst_7 : f32 to vector<8x128xf32>
    %8 = arith.cmpf ogt, %5, %7 : vector<8x128xf32>
    %9 = vector.broadcast %6 : f32 to vector<8x128xf32>
    %10 = arith.mulf %9, %5 : vector<8x128xf32>
    %11 = arith.select %8, %5, %10 : vector<8x128xi1>, vector<8x128xf32>
    %12 = arith.truncf %11 : vector<8x128xf32> to vector<8x128xbf16>
    %c0_8 = arith.constant 0 : index
    %c0_9 = arith.constant 0 : index
    %13 = vector.load %arg5[%c0_8, %c0_9] : memref<128x128xbf16, #tpu.memory_space<vmem>>, vector<128x128xbf16>
    %cst_10 = arith.constant dense<0.000000e+00> : vector<8x128xf32>
    %14 = tpu.matmul %12, %13, %cst_10 {dimension_numbers = #tpu.dot_dimension_numbers<[1], [0], [0], [1], [0, 0, 1, 1], [], []>} : vector<8x128xbf16>, vector<128x128xbf16>, vector<8x128xf32> -> vector<8x128xf32>
    %c0_11 = arith.constant 0 : index
    %c0_12 = arith.constant 0 : index
    %15 = vector.load %arg6[%c0_11, %c0_12] : memref<1x128xf32, #tpu.memory_space<vmem>>, vector<1x128xf32>
    %16 = vector.broadcast %15 : vector<1x128xf32> to vector<8x128xf32>
    %17 = arith.addf %14, %16 : vector<8x128xf32>
    %c0_13 = arith.constant 0 : index
    %c0_14 = arith.constant 0 : index
    %18 = memref.load %arg7[%c0_13, %c0_14] : memref<1x1xf32, #tpu.memory_space<smem>>
    %cst_15 = arith.constant 0.000000e+00 : f32
    %19 = vector.broadcast %cst_15 : f32 to vector<8x128xf32>
    %20 = arith.cmpf ogt, %17, %19 : vector<8x128xf32>
    %21 = vector.broadcast %18 : f32 to vector<8x128xf32>
    %22 = arith.mulf %21, %17 : vector<8x128xf32>
    %23 = arith.select %20, %17, %22 : vector<8x128xi1>, vector<8x128xf32>
    %24 = arith.truncf %23 : vector<8x128xf32> to vector<8x128xbf16>
    %c0_16 = arith.constant 0 : index
    %c0_17 = arith.constant 0 : index
    %25 = vector.load %arg8[%c0_16, %c0_17] : memref<128x8xbf16, #tpu.memory_space<vmem>>, vector<128x8xbf16>
    %cst_18 = arith.constant dense<0.000000e+00> : vector<8x8xf32>
    %26 = tpu.matmul %24, %25, %cst_18 {dimension_numbers = #tpu.dot_dimension_numbers<[1], [0], [0], [1], [0, 0, 1, 1], [], []>} : vector<8x128xbf16>, vector<128x8xbf16>, vector<8x8xf32> -> vector<8x8xf32>
    %c0_19 = arith.constant 0 : index
    %c0_20 = arith.constant 0 : index
    %27 = vector.load %arg9[%c0_19, %c0_20] : memref<1x8xf32, #tpu.memory_space<vmem>>, vector<1x8xf32>
    %28 = vector.broadcast %27 : vector<1x8xf32> to vector<8x8xf32>
    %29 = arith.addf %26, %28 : vector<8x8xf32>
    %c0_21 = arith.constant 0 : index
    %c0_22 = arith.constant 0 : index
    %30 = vector.load %arg10[%c0_21, %c0_22] : memref<8x8xf32, #tpu.memory_space<vmem>>, vector<8x8xf32>
    tpu.vector_store %arg10[%c0_21, %c0_22], %29 {strides = array<i32>} : memref<8x8xf32, #tpu.memory_space<vmem>>, vector<8x8xf32>,
    return
  }
  func.func @transform_0(%arg0: i32) -> (i32, i32) {
    %c0_i32 = arith.constant 0 : i32
    %c0_i32_0 = arith.constant 0 : i32
    return %arg0, %c0_i32 : i32, i32
  }
  func.func @transform_1(%arg0: i32) -> (i32, i32) {
    %c0_i32 = arith.constant 0 : i32
    %c0_i32_0 = arith.constant 0 : i32
    %c0_i32_1 = arith.constant 0 : i32
    return %c0_i32, %c0_i32_0 : i32, i32
  }
  func.func @transform_2(%arg0: i32) -> (i32, i32) {
    %c0_i32 = arith.constant 0 : i32
    %c0_i32_0 = arith.constant 0 : i32
    %c0_i32_1 = arith.constant 0 : i32
    return %c0_i32, %c0_i32_0 : i32, i32
  }
  func.func @transform_3(%arg0: i32) -> (i32, i32) {
    %c0_i32 = arith.constant 0 : i32
    %c0_i32_0 = arith.constant 0 : i32
    %c0_i32_1 = arith.constant 0 : i32
    return %c0_i32, %c0_i32_0 : i32, i32
  }
  func.func @transform_4(%arg0: i32) -> (i32, i32) {
    %c0_i32 = arith.constant 0 : i32
    %c0_i32_0 = arith.constant 0 : i32
    %c0_i32_1 = arith.constant 0 : i32
    return %c0_i32, %c0_i32_0 : i32, i32
  }
  func.func @transform_5(%arg0: i32) -> (i32, i32) {
    %c0_i32 = arith.constant 0 : i32
    %c0_i32_0 = arith.constant 0 : i32
    %c0_i32_1 = arith.constant 0 : i32
    return %c0_i32, %c0_i32_0 : i32, i32
  }
  func.func @transform_6(%arg0: i32) -> (i32, i32) {
    %c0_i32 = arith.constant 0 : i32
    %c0_i32_0 = arith.constant 0 : i32
    %c0_i32_1 = arith.constant 0 : i32
    return %c0_i32, %c0_i32_0 : i32, i32
  }
  func.func @transform_7(%arg0: i32) -> (i32, i32) {
    %c0_i32 = arith.constant 0 : i32
    %c0_i32_0 = arith.constant 0 : i32
    %c0_i32_1 = arith.constant 0 : i32
    return %c0_i32, %c0_i32_0 : i32, i32
  }
  func.func @transform_8(%arg0: i32) -> (i32, i32) {
    %c0_i32 = arith.constant 0 : i32
    %c0_i32_0 = arith.constant 0 : i32
    %c0_i32_1 = arith.constant 0 : i32
    return %c0_i32, %c0_i32_0 : i32, i32
  }
  func.func @transform_9(%arg0: i32) -> (i32, i32) {
    %c0_i32 = arith.constant 0 : i32
    %c0_i32_0 = arith.constant 0 : i32
    return %arg0, %c0_i32 : i32, i32
  }
}

</mosaic_0001>

<llo_original>
// kernel: tpu_custom_call.1
$region0: #{tpu_custom_call.1}
  #allocation0 [shape = 'u32[]', space=smem, size = 0x4, offset = 0x4, fixed_abs, tag = 'smem constant byte address 0x4 - core index']
  #allocation1 [shape = 'u32[144,128]{1,0:T(1,128)}', space=vmem, size = 0x12000, scoped, tag = 'internal scratch']
  #allocation2 [shape = 'f32[1,1]{1,0:T(1,128)S(6)}', space=smem, size = 0x200, scoped, tag = 'scoped memory for tpu_custom_call.1']
  #allocation3 [shape = 'f32[1,1]{1,0:T(1,128)S(6)}', space=smem, size = 0x200, scoped, tag = 'scoped memory for tpu_custom_call.1']
  %s0 = inlined_call_operand.vmem [shape: bf16[32,32], index: 0, kind: input, shape index: {}]
  %s1 = inlined_call_operand.hbm [shape: bf16[32,128], index: 1, kind: input, shape index: {}]
  %s2 = inlined_call_operand.vmem [shape: f32[1,128], index: 2, kind: input, shape index: {}]
  %s3 = inlined_call_operand.<no memory space> [shape: f32[1,1], index: 3, kind: input, shape index: {}]
  %s4 = inlined_call_operand.vmem [shape: bf16[128,128], index: 4, kind: input, shape index: {}]
  %s5 = inlined_call_operand.vmem [shape: f32[1,128], index: 5, kind: input, shape index: {}]
  %s6 = inlined_call_operand.<no memory space> [shape: f32[1,1], index: 6, kind: input, shape index: {}]
  %s7 = inlined_call_operand.vmem [shape: bf16[128,8], index: 7, kind: input, shape index: {}]
  %s8 = inlined_call_operand.vmem [shape: f32[1,8], index: 8, kind: input, shape index: {}]
  %s9 = inlined_call_operand.vmem [shape: f32[32,8], index: 9, kind: output, shape index: {}]
  %s10 = sld [smem:[#allocation0]]
  $region73: #{tpu_custom_call.1} parent=0
    _
  %s12 = ssub.s32 1, %s10
  %s13 = scalar_select 0, %s12, %s10
  %14 = sst [smem:[#allocation2]] %s3
  %15 = sst [smem:[#allocation3]] %s6
  $region1: #{tpu_custom_call.1} parent=0
    #allocation4 [shape = 'u8[8192]{0}', space=vmem, size = 0x2000, scoped, tag = 'input window, operand 1, single buffered']
    #allocation5 [shape = 's32[2]{0}', space=sflag, size = 0x8, scoped, tag = 'scoped memory for tpu_custom_call.1']
    %16 = vsyncpa [#allocation5], 0
    loop: start=0, step=1, limit=6
    $region2: #{tpu_custom_call.1} parent=1 // loop_pre_header
      _
    $region3: #{tpu_custom_call.1} parent=1 // loop_header
      %s18 = sphi 0, %s22
      %p19 = scmp.ge.s32.totalorder %s18, 6
      %s28 = sphi 0, %s30
      %s31 = sphi 0, %s28
      %s32 = sphi 0, %s31
      %s48 = sphi 0, %s32
      %s52 = sphi 0, %s52
      %s54 = sphi 0, %s52
      %s55 = sphi 0, %s54
      %s69 = sphi 0, %s55
      %s73 = sphi 0, %s73
      %s75 = sphi 0, %s73
      %s76 = sphi 0, %s75
      %s90 = sphi 0, %s76
      %s94 = sphi 0, %s94
      %s96 = sphi 0, %s94
      %s97 = sphi 0, %s96
      %s111 = sphi 0, %s97
      %s115 = sphi 0, %s115
      %s117 = sphi 0, %s115
      %s118 = sphi 0, %s117
      %s132 = sphi 0, %s118
      %s136 = sphi 0, %s136
      %s138 = sphi 0, %s136
      %s139 = sphi 0, %s138
      %s153 = sphi 0, %s139
      %s157 = sphi 0, %s157
      %s159 = sphi 0, %s157
      %s160 = sphi 0, %s159
      %s174 = sphi 0, %s160
      %s178 = sphi 0, %s178
      %s180 = sphi 0, %s178
      %s181 = sphi 0, %s180
      %s195 = sphi 0, %s181
      %s199 = sphi 0, %s199
      %s201 = sphi 0, %s199
      %s202 = sphi 0, %s201
      %s216 = sphi 0, %s202
      %s222 = sphi 0, %s224
      %s225 = sphi 0, %s222
      %s226 = sphi 0, %s225
      %s242 = sphi 0, %s226
    $region4: #{tpu_custom_call.1} parent=1 // loop_header_branch
      %21 = sbr.rel (%p19) target = $region8
    $region5: #{tpu_custom_call.1} parent=1 // loop_body
      %s23 = ssub.s32 %s18, 1
      %s24 = ssub.s32 %s18, 2
      %s25 = sadd.s32 %s18, 1
      %s26 = ssub.s32 %s18, %s25
      %p27 = scmp.eq.s32.totalorder %s26, 0
      %s29 = sadd.s32 %s28, 1
      %s30 = scalar_select %p27, %s28, %s29
      %p33 = pneg %p27
      %p34 = scmp.eq.s32.totalorder %s18, 3
      %p35 = por %p33, %p34
      %p36 = scmp.ne.s32.totalorder %s28, %s31
      %p37 = scmp.eq.s32.totalorder %s18, 0
      %p38 = por %p36, %p37
      %p39 = scmp.ne.s32.totalorder %s28, %s31
      %p40 = scmp.eq.s32.totalorder %s23, 3
      %p41 = por %p39, %p40
      %p42 = scmp.ne.s32.totalorder %s31, %s32
      %p43 = scmp.eq.s32.totalorder %s23, 0
      %p44 = por %p42, %p43
      %p45 = scmp.ne.s32.totalorder %s31, %s32
      %p46 = scmp.eq.s32.totalorder %s24, 3
      %p47 = por %p45, %p46
      %p49 = scmp.ne.s32.totalorder %s32, %s48
      %p50 = scmp.eq.s32.totalorder %s24, 0
      %p51 = por %p49, %p50
      %s53 = sadd.s32 %s52, 1
      %p56 = scmp.eq.s32.totalorder %s18, 3
      %p57 = scmp.ne.s32.totalorder %s52, %s54
      %p58 = scmp.eq.s32.totalorder %s18, 0
      %p59 = por %p57, %p58
      %p60 = scmp.ne.s32.totalorder %s52, %s54
      %p61 = scmp.eq.s32.totalorder %s23, 3
      %p62 = por %p60, %p61
      %p63 = scmp.ne.s32.totalorder %s54, %s55
      %p64 = scmp.eq.s32.totalorder %s23, 0
      %p65 = por %p63, %p64
      %p66 = scmp.ne.s32.totalorder %s54, %s55
      %p67 = scmp.eq.s32.totalorder %s24, 3
      %p68 = por %p66, %p67
      %p70 = scmp.ne.s32.totalorder %s55, %s69
      %p71 = scmp.eq.s32.totalorder %s24, 0
      %p72 = por %p70, %p71
      %s74 = sadd.s32 %s73, 1
      %p77 = scmp.eq.s32.totalorder %s18, 3
      %p78 = scmp.ne.s32.totalorder %s73, %s75
      %p79 = scmp.eq.s32.totalorder %s18, 0
      %p80 = por %p78, %p79
      %p81 = scmp.ne.s32.totalorder %s73, %s75
      %p82 = scmp.eq.s32.totalorder %s23, 3
      %p83 = por %p81, %p82
      %p84 = scmp.ne.s32.totalorder %s75, %s76
      %p85 = scmp.eq.s32.totalorder %s23, 0
      %p86 = por %p84, %p85
      %p87 = scmp.ne.s32.totalorder %s75, %s76
      %p88 = scmp.eq.s32.totalorder %s24, 3
      %p89 = por %p87, %p88
      %p91 = scmp.ne.s32.totalorder %s76, %s90
      %p92 = scmp.eq.s32.totalorder %s24, 0
      %p93 = por %p91, %p92
      %s95 = sadd.s32 %s94, 1
      %p98 = scmp.eq.s32.totalorder %s18, 3
      %p99 = scmp.ne.s32.totalorder %s94, %s96
      %p100 = scmp.eq.s32.totalorder %s18, 0
      %p101 = por %p99, %p100
      %p102 = scmp.ne.s32.totalorder %s94, %s96
      %p103 = scmp.eq.s32.totalorder %s23, 3
      %p104 = por %p102, %p103
      %p105 = scmp.ne.s32.totalorder %s96, %s97
      %p106 = scmp.eq.s32.totalorder %s23, 0
      %p107 = por %p105, %p106
      %p108 = scmp.ne.s32.totalorder %s96, %s97
      %p109 = scmp.eq.s32.totalorder %s24, 3
      %p110 = por %p108, %p109
      %p112 = scmp.ne.s32.totalorder %s97, %s111
      %p113 = scmp.eq.s32.totalorder %s24, 0
      %p114 = por %p112, %p113
      %s116 = sadd.s32 %s115, 1
      %p119 = scmp.eq.s32.totalorder %s18, 3
      %p120 = scmp.ne.s32.totalorder %s115, %s117
      %p121 = scmp.eq.s32.totalorder %s18, 0
      %p122 = por %p120, %p121
      %p123 = scmp.ne.s32.totalorder %s115, %s117
      %p124 = scmp.eq.s32.totalorder %s23, 3
      %p125 = por %p123, %p124
      %p126 = scmp.ne.s32.totalorder %s117, %s118
      %p127 = scmp.eq.s32.totalorder %s23, 0
      %p128 = por %p126, %p127
      %p129 = scmp.ne.s32.totalorder %s117, %s118
      %p130 = scmp.eq.s32.totalorder %s24, 3
      %p131 = por %p129, %p130
      %p133 = scmp.ne.s32.totalorder %s118, %s132
      %p134 = scmp.eq.s32.totalorder %s24, 0
      %p135 = por %p133, %p134
      %s137 = sadd.s32 %s136, 1
      %p140 = scmp.eq.s32.totalorder %s18, 3
      %p141 = scmp.ne.s32.totalorder %s136, %s138
      %p142 = scmp.eq.s32.totalorder %s18, 0
      %p143 = por %p141, %p142
      %p144 = scmp.ne.s32.totalorder %s136, %s138
      %p145 = scmp.eq.s32.totalorder %s23, 3
      %p146 = por %p144, %p145
      %p147 = scmp.ne.s32.totalorder %s138, %s139
      %p148 = scmp.eq.s32.totalorder %s23, 0
      %p149 = por %p147, %p148
      %p150 = scmp.ne.s32.totalorder %s138, %s139
      %p151 = scmp.eq.s32.totalorder %s24, 3
      %p152 = por %p150, %p151
      %p154 = scmp.ne.s32.totalorder %s139, %s153
      %p155 = scmp.eq.s32.totalorder %s24, 0
      %p156 = por %p154, %p155
      %s158 = sadd.s32 %s157, 1
      %p161 = scmp.eq.s32.totalorder %s18, 3
      %p162 = scmp.ne.s32.totalorder %s157, %s159
      %p163 = scmp.eq.s32.totalorder %s18, 0
      %p164 = por %p162, %p163
      %p165 = scmp.ne.s32.totalorder %s157, %s159
      %p166 = scmp.eq.s32.totalorder %s23, 3
      %p167 = por %p165, %p166
      %p168 = scmp.ne.s32.totalorder %s159, %s160
      %p169 = scmp.eq.s32.totalorder %s23, 0
      %p170 = por %p168, %p169
      %p171 = scmp.ne.s32.totalorder %s159, %s160
      %p172 = scmp.eq.s32.totalorder %s24, 3
      %p173 = por %p171, %p172
      %p175 = scmp.ne.s32.totalorder %s160, %s174
      %p176 = scmp.eq.s32.totalorder %s24, 0
      %p177 = por %p175, %p176
      %s179 = sadd.s32 %s178, 1
      %p182 = scmp.eq.s32.totalorder %s18, 3
      %p183 = scmp.ne.s32.totalorder %s178, %s180
      %p184 = scmp.eq.s32.totalorder %s18, 0
      %p185 = por %p183, %p184
      %p186 = scmp.ne.s32.totalorder %s178, %s180
      %p187 = scmp.eq.s32.totalorder %s23, 3
      %p188 = por %p186, %p187
      %p189 = scmp.ne.s32.totalorder %s180, %s181
      %p190 = scmp.eq.s32.totalorder %s23, 0
      %p191 = por %p189, %p190
      %p192 = scmp.ne.s32.totalorder %s180, %s181
      %p193 = scmp.eq.s32.totalorder %s24, 3
      %p194 = por %p192, %p193
      %p196 = scmp.ne.s32.totalorder %s181, %s195
      %p197 = scmp.eq.s32.totalorder %s24, 0
      %p198 = por %p196, %p197
      %s200 = sadd.s32 %s199, 1
      %p203 = scmp.eq.s32.totalorder %s18, 3
      %p204 = scmp.ne.s32.totalorder %s199, %s201
      %p205 = scmp.eq.s32.totalorder %s18, 0
      %p206 = por %p204, %p205
      %p207 = scmp.ne.s32.totalorder %s199, %s201
      %p208 = scmp.eq.s32.totalorder %s23, 3
      %p209 = por %p207, %p208
      %p210 = scmp.ne.s32.totalorder %s201, %s202
      %p211 = scmp.eq.s32.totalorder %s23, 0
      %p212 = por %p210, %p211
      %p213 = scmp.ne.s32.totalorder %s201, %s202
      %p214 = scmp.eq.s32.totalorder %s24, 3
      %p215 = por %p213, %p214
      %p217 = scmp.ne.s32.totalorder %s202, %s216
      %p218 = scmp.eq.s32.totalorder %s24, 0
      %p219 = por %p217, %p218
      %s220 = ssub.s32 %s18, %s25
      %p221 = scmp.eq.s32.totalorder %s220, 0
      %s223 = sadd.s32 %s222, 1
      %s224 = scalar_select %p221, %s222, %s223
      %p227 = pneg %p221
      %p228 = scmp.eq.s32.totalorder %s18, 3
      %p229 = por %p227, %p228
      %p230 = scmp.ne.s32.totalorder %s222, %s225
      %p231 = scmp.eq.s32.totalorder %s18, 0
      %p232 = por %p230, %p231
      %p233 = scmp.ne.s32.totalorder %s222, %s225
      %p234 = scmp.eq.s32.totalorder %s23, 3
      %p235 = por %p233, %p234
      %p236 = scmp.ne.s32.totalorder %s225, %s226
      %p237 = scmp.eq.s32.totalorder %s23, 0
      %p238 = por %p236, %p237
      %p239 = scmp.ne.s32.totalorder %s225, %s226
      %p240 = scmp.eq.s32.totalorder %s24, 3
      %p241 = por %p239, %p240
      %p243 = scmp.ne.s32.totalorder %s226, %s242
      %p244 = scmp.eq.s32.totalorder %s24, 0
      %p245 = por %p243, %p244
      %p246 = scmp.le.s32.totalorder 1, %s18
      %p247 = scmp.lt.s32.totalorder %s18, 5
      %p248 = pnand %p246, %p247
      %p249 = pneg %p248
      // Predicated region
      $region9: #{tpu_custom_call.1} parent=5 // pred_check
        _
      $region10: #{tpu_custom_call.1} parent=5 // pred_check_branch
        %251 = sbr.rel (%p248) target = $region12
      $region11: #{tpu_custom_call.1} parent=5 // pred_region
        %s252 = ssub.s32 %s18, 1
        // Predicated region
        $region13: #{tpu_custom_call.1} parent=11 // pred_check
          %p253 = pneg %p65
        $region14: #{tpu_custom_call.1} parent=11 // pred_check_branch
          %255 = sbr.rel (%p253) target = $region16
        $region15: #{tpu_custom_call.1} parent=11 // pred_region
          %s257 = ssub.s32 256, 256
          %258 = vsyncadd [#allocation5], %s257
          %s259 = sshll.u32 [#allocation4], 4
          %s260 = int_to_ptr.vmem [resolvable:$true] %s259
          %265 = dma.hbm_to_vmem [thread:$0]  %s1, 256, %s260, [#allocation5], 64, 64, 4
        $region16: #{tpu_custom_call.1} parent=11 // pred_fallthru
          _
        // Predicated region
        $region17: #{tpu_custom_call.1} parent=11 // pred_check
          %p266 = pneg %p86
        $region18: #{tpu_custom_call.1} parent=11 // pred_check_branch
          %268 = sbr.rel (%p266) target = $region20
        $region19: #{tpu_custom_call.1} parent=11 // pred_region
          _
        $region20: #{tpu_custom_call.1} parent=11 // pred_fallthru
          _
        // Predicated region
        $region21: #{tpu_custom_call.1} parent=11 // pred_check
          %p269 = pneg %p107
        $region22: #{tpu_custom_call.1} parent=11 // pred_check_branch
          %271 = sbr.rel (%p269) target = $region24
        $region23: #{tpu_custom_call.1} parent=11 // pred_region
          _
        $region24: #{tpu_custom_call.1} parent=11 // pred_fallthru
          _
        // Predicated region
        $region25: #{tpu_custom_call.1} parent=11 // pred_check
          %p272 = pneg %p128
        $region26: #{tpu_custom_call.1} parent=11 // pred_check_branch
          %274 = sbr.rel (%p272) target = $region28
        $region27: #{tpu_custom_call.1} parent=11 // pred_region
          _
        $region28: #{tpu_custom_call.1} parent=11 // pred_fallthru
          _
        // Predicated region
        $region29: #{tpu_custom_call.1} parent=11 // pred_check
          %p275 = pneg %p149
        $region30: #{tpu_custom_call.1} parent=11 // pred_check_branch
          %277 = sbr.rel (%p275) target = $region32
        $region31: #{tpu_custom_call.1} parent=11 // pred_region
          _
        $region32: #{tpu_custom_call.1} parent=11 // pred_fallthru
          _
        // Predicated region
        $region33: #{tpu_custom_call.1} parent=11 // pred_check
          %p278 = pneg %p170
        $region34: #{tpu_custom_call.1} parent=11 // pred_check_branch
          %280 = sbr.rel (%p278) target = $region36
        $region35: #{tpu_custom_call.1} parent=11 // pred_region
          _
        $region36: #{tpu_custom_call.1} parent=11 // pred_fallthru
          _
        // Predicated region
        $region37: #{tpu_custom_call.1} parent=11 // pred_check
          %p281 = pneg %p191
        $region38: #{tpu_custom_call.1} parent=11 // pred_check_branch
          %283 = sbr.rel (%p281) target = $region40
        $region39: #{tpu_custom_call.1} parent=11 // pred_region
          _
        $region40: #{tpu_custom_call.1} parent=11 // pred_fallthru
          _
        // Predicated region
        $region41: #{tpu_custom_call.1} parent=11 // pred_check
          %p284 = pneg %p212
        $region42: #{tpu_custom_call.1} parent=11 // pred_check_branch
          %286 = sbr.rel (%p284) target = $region44
        $region43: #{tpu_custom_call.1} parent=11 // pred_region
          _
        $region44: #{tpu_custom_call.1} parent=11 // pred_fallthru
          _
      $region12: #{tpu_custom_call.1} parent=5 // pred_fallthru
        _
      %p287 = scmp.lt.s32.totalorder %s18, 4
      // Predicated region
      $region45: #{tpu_custom_call.1} parent=5 // pred_check
        %p288 = pneg %p287
      $region46: #{tpu_custom_call.1} parent=5 // pred_check_branch
        %290 = sbr.rel (%p288) target = $region48
      $region47: #{tpu_custom_call.1} parent=5 // pred_region
        // Predicated region
        $region49: #{tpu_custom_call.1} parent=47 // pred_check
          %p291 = pneg %p38
        $region50: #{tpu_custom_call.1} parent=47 // pred_check_branch
          %293 = sbr.rel (%p291) target = $region52
        $region51: #{tpu_custom_call.1} parent=47 // pred_region
          %p294 = scmp.lt.s32.totalorder %s18, 3
          %s295 = scalar_select %p294, %s18, 3
          %s296 = smul.addr %s295, 4
          %s297 = scalar_lea.vmem %s0, %s296
        $region52: #{tpu_custom_call.1} parent=47 // pred_fallthru
          _
      $region48: #{tpu_custom_call.1} parent=5 // pred_fallthru
        _
      %p298 = scmp.le.s32.totalorder 1, %s18
      %p299 = scmp.lt.s32.totalorder %s18, 5
      %p300 = pnand %p298, %p299
      %p301 = pneg %p300
      // Predicated region
      $region53: #{tpu_custom_call.1} parent=5 // pred_check
        _
      $region54: #{tpu_custom_call.1} parent=5 // pred_check_branch
        %303 = sbr.rel (%p300) target = $region56
      $region55: #{tpu_custom_call.1} parent=5 // pred_region
        %s304 = ssub.s32 %s18, 1
        // Predicated region
        $region57: #{tpu_custom_call.1} parent=55 // pred_check
          %p305 = pneg %p65
        $region58: #{tpu_custom_call.1} parent=55 // pred_check_branch
          %307 = sbr.rel (%p305) target = $region60
        $region59: #{tpu_custom_call.1} parent=55 // pred_region
          %308 = dma.done [#allocation5], 256
        $region60: #{tpu_custom_call.1} parent=55 // pred_fallthru
          _
        %p309 = scmp.lt.s32.totalorder %s23, 3
        %s310 = scalar_select %p309, %s23, 3
        %s311 = smul.addr %s310, 4
        %s312 = scalar_lea.vmem %s0, %s311
        %p313 = pneg %p44
        %p314 = pneg %p41
        %p315 = pneg %p65
        %p316 = pneg %p62
        %p317 = pneg %p86
        %p318 = pneg %p83
        %p319 = pneg %p107
        %p320 = pneg %p104
        %p321 = pneg %p128
        %p322 = pneg %p125
        %p323 = pneg %p149
        %p324 = pneg %p146
        %p325 = pneg %p170
        %p326 = pneg %p167
        %p327 = pneg %p191
        %p328 = pneg %p188
        %p329 = pneg %p212
        %p330 = pneg %p209
        %p331 = pneg %p238
        %p332 = pneg %p235
        %p333 = scmp.lt.s32.totalorder %s23, 3
        %s334 = scalar_select %p333, %s23, 3
        %s335 = smul.addr %s334, 8
        %s336 = scalar_lea.vmem %s9, %s335
        %p337 = scmp.lt.s32.totalorder %s23, 3
        %s338 = scalar_select %p337, %s23, 3
        %s339 = smul.addr %s338, 4
        %s340 = scalar_lea.vmem %s0, %s339
        %p341 = scmp.lt.s32.totalorder %s23, 3
        %s342 = scalar_select %p341, %s23, 3
        %s343 = smul.addr %s342, 8
        %s344 = scalar_lea.vmem %s9, %s343
        %v346 = vld [vmem:[%s340] sm:$0xf]
        %v347 = vld [vmem:[#allocation4] sm:$0xf]
        %v348 = vld [vmem:[#allocation4 + $0x4] sm:$0xf]
        %v349 = vld [vmem:[#allocation4 + $0x8] sm:$0xf]
        %v350 = vld [vmem:[#allocation4 + $0xc] sm:$0xf]
        %v351 = vld [vmem:[%s2] sm:$0x1]
        %v353 = vlaneseq
        %v354 = vshrl.u32 %v353, 7
        %v355 = vsub.s32 0, %v354
        %v356 = vrot.slane %v351, %v355
        %v362 = vunpack.c.l.b16 %v347
        %v363 = vunpack.c.l.b16 %v348
        %v364 = vunpack.c.l.b16 %v349
        %v365 = vunpack.c.l.b16 %v350
        %v366 = vpack.c.b16 %v363, %v362
        %v367 = vpack.c.b16 %v365, %v364
        %vm370 = vcmask 261120
        %v372 = vsel %vm370, %v346, 0
        %374 = vmatprep.subr.bf16.mxu0 0
        %375 = vmatpush1.bf16.msra.mxu0 %v366
        %376 = vmatprep.subr.bf16.mxu0 0
        %377 = vmatpush1.bf16.msra.mxu0 %v367
        %378 = vmatprep.subr.bf16.mxu0 0
        %379 = vmatpush1.bf16.msra.mxu0 0
        %380 = vmatprep.subr.bf16.mxu0 0
        %381 = vmatpush1.bf16.msra.mxu0 0
        %382 = vmatprep.subr.bf16.mxu0 0
        %383 = vmatpush1.bf16.msra.mxu0 0
        %384 = vmatprep.subr.bf16.mxu0 0
        %385 = vmatpush1.bf16.msra.mxu0 0
        %386 = vmatprep.subr.bf16.mxu0 0
        %387 = vmatpush1.bf16.msra.mxu0 0
        %388 = vmatprep.subr.bf16.mxu0 0
        %389 = vmatpush1.bf16.msra.mxu0 0
        %390 = vmatprep.subr.bf16.mxu0 0
        %391 = vmatpush1.bf16.msra.mxu0 0
        %392 = vmatprep.subr.bf16.mxu0 0
        %393 = vmatpush1.bf16.msra.mxu0 0
        %394 = vmatprep.subr.bf16.mxu0 0
        %395 = vmatpush1.bf16.msra.mxu0 0
        %396 = vmatprep.subr.bf16.mxu0 0
        %397 = vmatpush1.bf16.msra.mxu0 0
        %398 = vmatprep.subr.bf16.mxu0 0
        %399 = vmatpush1.bf16.msra.mxu0 0
        %400 = vmatprep.subr.bf16.mxu0 0
        %401 = vmatpush1.bf16.msra.mxu0 0
        %402 = vmatprep.subr.bf16.mxu0 0
        %403 = vmatpush1.bf16.msra.mxu0 0
        %404 = vmatprep.subr.bf16.mxu0 0
        %405 = vmatpush1.bf16.msra.mxu0 0
        %406 = vmatprep.mubr.bf16.mxu0 0
        %407 = vmatmul.mubr.bf16.gmra.mrb[0].mxu0 %v372
        %v408 = vpop.f32.mrb[0].mxu0
        %v409 = vadd.f32 %v356, %v408
        %v410 = vpop.f32.mrb[0].mxu0
        %v411 = vpop.f32.mrb[0].mxu0
        %v412 = vpop.f32.mrb[0].mxu0
        %413 = vdwg.mxu0
        %s414 = sld [smem:[#allocation2]]
        %vm415 = vcmp.gt.f32.partialorder %v409, 0.0
        %v416 = vstv %s414
        %v417 = vmul.f32 %v416, %v409
        %v418 = vsel %vm415, %v409, %v417
        %v419 = vpack.c.bf16 %v418, %v418
        %v420 = vld [vmem:[%s4] sm:$0xf]
        %v421 = vld [vmem:[%s4 + $0x4] sm:$0xf]
        %v422 = vld [vmem:[%s4 + $0x8] sm:$0xf]
        %v423 = vld [vmem:[%s4 + $0xc] sm:$0xf]
        %v424 = vld [vmem:[%s4 + $0x10] sm:$0xf]
        %v425 = vld [vmem:[%s4 + $0x14] sm:$0xf]
        %v426 = vld [vmem:[%s4 + $0x18] sm:$0xf]
        %v427 = vld [vmem:[%s4 + $0x1c] sm:$0xf]
        %v428 = vld [vmem:[%s4 + $0x20] sm:$0xf]
        %v429 = vld [vmem:[%s4 + $0x24] sm:$0xf]
        %v430 = vld [vmem:[%s4 + $0x28] sm:$0xf]
        %v431 = vld [vmem:[%s4 + $0x2c] sm:$0xf]
        %v432 = vld [vmem:[%s4 + $0x30] sm:$0xf]
        %v433 = vld [vmem:[%s4 + $0x34] sm:$0xf]
        %v434 = vld [vmem:[%s4 + $0x38] sm:$0xf]
        %v435 = vld [vmem:[%s4 + $0x3c] sm:$0xf]
        %v436 = vld [vmem:[%s5] sm:$0x1]
        %v438 = vlaneseq
        %v439 = vshrl.u32 %v438, 7
        %v440 = vsub.s32 0, %v439
        %v441 = vrot.slane %v436, %v440
        %v459 = vunpack.c.l.b16 %v420
        %v460 = vunpack.c.l.b16 %v421
        %v461 = vunpack.c.l.b16 %v422
        %v462 = vunpack.c.l.b16 %v423
        %v463 = vunpack.c.l.b16 %v424
        %v464 = vunpack.c.l.b16 %v425
        %v465 = vunpack.c.l.b16 %v426
        %v466 = vunpack.c.l.b16 %v427
        %v467 = vunpack.c.l.b16 %v428
        %v468 = vunpack.c.l.b16 %v429
        %v469 = vunpack.c.l.b16 %v430
        %v470 = vunpack.c.l.b16 %v431
        %v471 = vunpack.c.l.b16 %v432
        %v472 = vunpack.c.l.b16 %v433
        %v473 = vunpack.c.l.b16 %v434
        %v474 = vunpack.c.l.b16 %v435
        %v475 = vpack.c.b16 %v460, %v459
        %v476 = vpack.c.b16 %v462, %v461
        %v477 = vpack.c.b16 %v464, %v463
        %v478 = vpack.c.b16 %v466, %v465
        %v479 = vpack.c.b16 %v468, %v467
        %v480 = vpack.c.b16 %v470, %v469
        %v481 = vpack.c.b16 %v472, %v471
        %v482 = vpack.c.b16 %v474, %v473
        %491 = vmatprep.subr.bf16.mxu0 0
        %492 = vmatpush1.bf16.msra.mxu0 %v475
        %493 = vmatprep.subr.bf16.mxu0 0
        %494 = vmatpush1.bf16.msra.mxu0 %v476
        %495 = vmatprep.subr.bf16.mxu0 0
        %496 = vmatpush1.bf16.msra.mxu0 %v477
        %497 = vmatprep.subr.bf16.mxu0 0
        %498 = vmatpush1.bf16.msra.mxu0 %v478
        %499 = vmatprep.subr.bf16.mxu0 0
        %500 = vmatpush1.bf16.msra.mxu0 %v479
        %501 = vmatprep.subr.bf16.mxu0 0
        %502 = vmatpush1.bf16.msra.mxu0 %v480
        %503 = vmatprep.subr.bf16.mxu0 0
        %504 = vmatpush1.bf16.msra.mxu0 %v481
        %505 = vmatprep.subr.bf16.mxu0 0
        %506 = vmatpush1.bf16.msra.mxu0 %v482
        %507 = vmatprep.subr.bf16.mxu0 0
        %508 = vmatpush1.bf16.msra.mxu0 0
        %509 = vmatprep.subr.bf16.mxu0 0
        %510 = vmatpush1.bf16.msra.mxu0 0
        %511 = vmatprep.subr.bf16.mxu0 0
        %512 = vmatpush1.bf16.msra.mxu0 0
        %513 = vmatprep.subr.bf16.mxu0 0
        %514 = vmatpush1.bf16.msra.mxu0 0
        %515 = vmatprep.subr.bf16.mxu0 0
        %516 = vmatpush1.bf16.msra.mxu0 0
        %517 = vmatprep.subr.bf16.mxu0 0
        %518 = vmatpush1.bf16.msra.mxu0 0
        %519 = vmatprep.subr.bf16.mxu0 0
        %520 = vmatpush1.bf16.msra.mxu0 0
        %521 = vmatprep.subr.bf16.mxu0 0
        %522 = vmatpush1.bf16.msra.mxu0 0
        %523 = vmatprep.mubr.bf16.mxu0 0
        %524 = vmatmul.mubr.bf16.gmra.mrb[0].mxu0 %v419
        %v525 = vpop.f32.mrb[0].mxu0
        %v526 = vadd.f32 %v441, %v525
        %v527 = vpop.f32.mrb[0].mxu0
        %v528 = vpop.f32.mrb[0].mxu0
        %v529 = vpop.f32.mrb[0].mxu0
        %530 = vdwg.mxu0
        %s531 = sld [smem:[#allocation3]]
        %vm532 = vcmp.gt.f32.partialorder %v526, 0.0
        %v533 = vstv %s531
        %v534 = vmul.f32 %v533, %v526
        %v535 = vsel %vm532, %v526, %v534
        %v536 = vpack.c.bf16 %v535, %v535
        %v537 = vld [vmem:[%s7] sm:$0xf]
        %v538 = vld [vmem:[%s7 + $0x4] sm:$0xf]
        %v539 = vld [vmem:[%s7 + $0x8] sm:$0xf]
        %v540 = vld [vmem:[%s7 + $0xc] sm:$0xf]
        %v541 = vld [vmem:[%s7 + $0x10] sm:$0xf]
        %v542 = vld [vmem:[%s7 + $0x14] sm:$0xf]
        %v543 = vld [vmem:[%s7 + $0x18] sm:$0xf]
        %v544 = vld [vmem:[%s7 + $0x1c] sm:$0xf]
        %v545 = vld [vmem:[%s7 + $0x20] sm:$0xf]
        %v546 = vld [vmem:[%s7 + $0x24] sm:$0xf]
        %v547 = vld [vmem:[%s7 + $0x28] sm:$0xf]
        %v548 = vld [vmem:[%s7 + $0x2c] sm:$0xf]
        %v549 = vld [vmem:[%s7 + $0x30] sm:$0xf]
        %v550 = vld [vmem:[%s7 + $0x34] sm:$0xf]
        %v551 = vld [vmem:[%s7 + $0x38] sm:$0xf]
        %v552 = vld [vmem:[%s7 + $0x3c] sm:$0xf]
        %v553 = vld [vmem:[%s8] sm:$0x1]
        %v555 = vlaneseq
        %v556 = vshrl.u32 %v555, 7
        %v557 = vsub.s32 0, %v556
        %v558 = vrot.slane %v553, %v557
        %v576 = vunpack.c.l.b16 %v537
        %v577 = vunpack.c.l.b16 %v538
        %v578 = vunpack.c.l.b16 %v539
        %v579 = vunpack.c.l.b16 %v540
        %v580 = vunpack.c.l.b16 %v541
        %v581 = vunpack.c.l.b16 %v542
        %v582 = vunpack.c.l.b16 %v543
        %v583 = vunpack.c.l.b16 %v544
        %v584 = vunpack.c.l.b16 %v545
        %v585 = vunpack.c.l.b16 %v546
        %v586 = vunpack.c.l.b16 %v547
        %v587 = vunpack.c.l.b16 %v548
        %v588 = vunpack.c.l.b16 %v549
        %v589 = vunpack.c.l.b16 %v550
        %v590 = vunpack.c.l.b16 %v551
        %v591 = vunpack.c.l.b16 %v552
        %v592 = vpack.c.b16 %v577, %v576
        %v593 = vpack.c.b16 %v579, %v578
        %v594 = vpack.c.b16 %v581, %v580
        %v595 = vpack.c.b16 %v583, %v582
        %v596 = vpack.c.b16 %v585, %v584
        %v597 = vpack.c.b16 %v587, %v586
        %v598 = vpack.c.b16 %v589, %v588
        %v599 = vpack.c.b16 %v591, %v590
        %608 = vmatprep.subr.bf16.mxu0 0
        %609 = vmatpush1.bf16.msra.mxu0 %v592
        %610 = vmatprep.subr.bf16.mxu0 0
        %611 = vmatpush1.bf16.msra.mxu0 %v593
        %612 = vmatprep.subr.bf16.mxu0 0
        %613 = vmatpush1.bf16.msra.mxu0 %v594
        %614 = vmatprep.subr.bf16.mxu0 0
        %615 = vmatpush1.bf16.msra.mxu0 %v595
        %616 = vmatprep.subr.bf16.mxu0 0
        %617 = vmatpush1.bf16.msra.mxu0 %v596
        %618 = vmatprep.subr.bf16.mxu0 0
        %619 = vmatpush1.bf16.msra.mxu0 %v597
        %620 = vmatprep.subr.bf16.mxu0 0
        %621 = vmatpush1.bf16.msra.mxu0 %v598
        %622 = vmatprep.subr.bf16.mxu0 0
        %623 = vmatpush1.bf16.msra.mxu0 %v599
        %624 = vmatprep.subr.bf16.mxu0 0
        %625 = vmatpush1.bf16.msra.mxu0 0
        %626 = vmatprep.subr.bf16.mxu0 0
        %627 = vmatpush1.bf16.msra.mxu0 0
        %628 = vmatprep.subr.bf16.mxu0 0
        %629 = vmatpush1.bf16.msra.mxu0 0
        %630 = vmatprep.subr.bf16.mxu0 0
        %631 = vmatpush1.bf16.msra.mxu0 0
        %632 = vmatprep.subr.bf16.mxu0 0
        %633 = vmatpush1.bf16.msra.mxu0 0
        %634 = vmatprep.subr.bf16.mxu0 0
        %635 = vmatpush1.bf16.msra.mxu0 0
        %636 = vmatprep.subr.bf16.mxu0 0
        %637 = vmatpush1.bf16.msra.mxu0 0
        %638 = vmatprep.subr.bf16.mxu0 0
        %639 = vmatpush1.bf16.msra.mxu0 0
        %640 = vmatprep.mubr.bf16.mxu0 0
        %641 = vmatmul.mubr.bf16.gmra.mrb[0].mxu0 %v536
        %v642 = vpop.f32.mrb[0].mxu0
        %v643 = vadd.f32 %v558, %v642
        %v644 = vpop.f32.mrb[0].mxu0
        %v645 = vpop.f32.mrb[0].mxu0
        %v646 = vpop.f32.mrb[0].mxu0
        %647 = vdwg.mxu0
        %vm648 = vcmask 64512
        %649 = vst.msk [vmem:[%s344] sm:$0xff] %vm648, %v643
        %p650 = scmp.lt.s32.totalorder %s23, 3
        %s651 = scalar_select %p650, %s23, 3
        %s652 = smul.addr %s651, 8
        %s653 = scalar_lea.vmem %s9, %s652
        // Predicated region
        $region61: #{tpu_custom_call.1} parent=55 // pred_check
          %p654 = pneg %p235
        $region62: #{tpu_custom_call.1} parent=55 // pred_check_branch
          %656 = sbr.rel (%p654) target = $region64
        $region63: #{tpu_custom_call.1} parent=55 // pred_region
          _
        $region64: #{tpu_custom_call.1} parent=55 // pred_fallthru
          _
      $region56: #{tpu_custom_call.1} parent=5 // pred_fallthru
        _
      %p657 = scmp.le.s32.totalorder 2, %s18
      // Predicated region
      $region65: #{tpu_custom_call.1} parent=5 // pred_check
        %p658 = pneg %p657
      $region66: #{tpu_custom_call.1} parent=5 // pred_check_branch
        %660 = sbr.rel (%p658) target = $region68
      $region67: #{tpu_custom_call.1} parent=5 // pred_region
        %s661 = ssub.s32 %s18, 2
        // Predicated region
        $region69: #{tpu_custom_call.1} parent=67 // pred_check
          %p662 = pneg %p241
        $region70: #{tpu_custom_call.1} parent=67 // pred_check_branch
          %664 = sbr.rel (%p662) target = $region72
        $region71: #{tpu_custom_call.1} parent=67 // pred_region
          %p665 = scmp.lt.s32.totalorder %s24, 3
          %s666 = scalar_select %p665, %s24, 3
          %s667 = smul.addr %s666, 8
          %s668 = scalar_lea.vmem %s9, %s667
        $region72: #{tpu_custom_call.1} parent=67 // pred_fallthru
          _
      $region68: #{tpu_custom_call.1} parent=5 // pred_fallthru
        _
    $region6: #{tpu_custom_call.1} parent=1 // loop_footer
      %s22 = sadd.s32 1, %s18
    $region7: #{tpu_custom_call.1} parent=1 // loop_footer_branch
      %17 = sbr.rel target = $region3
    $region8: #{tpu_custom_call.1} parent=1 // loop_exit
      _
    %669 = vsyncpa [#allocation5], 1
    %s670 = scalar_lea.sflag [#allocation5], 1
    %671 = vsyncpa %s670, 1

</llo_original>
